<compile_context>
chip_gen: v6e
topology: v6e:2x2x1
jax: 0.10.0
libtpu: 0.0.40
codegen_flags: <defaults>
</compile_context>

<pallas_src>
import jax
import jax.numpy as jnp
from jax.experimental import pallas as pl
from jax.experimental.pallas import tpu as pltpu

MAX_TILE_B = 1024  # upper bound on batch rows per grid step


def _pick_tile_b(batch, max_tile_b=MAX_TILE_B):
    """Large tiles to amortize per-step overhead; >=2 tiles when possible (v7x megacore)."""
    half = -(-batch // 2)                       # cdiv(batch, 2)
    tile = ((half + 127) // 128) * 128          # round up to a lane multiple
    return max(128, min(max_tile_b, tile))


def critic_kernel(x_ref, w1_ref, b1_ref, w2_ref, b2_ref, w3_ref, b3_ref, o_ref):
    # x: (tile_b, n_state) f32; w*/b* f32 resident in VMEM; b3 scalar in SMEM.
    x = x_ref[...]

    # Layer 1: MXU matmul with f32 accumulate; bias add + ReLU on the VPU.
    h1 = jnp.dot(x, w1_ref[...], preferred_element_type=jnp.float32) + b1_ref[...]
    h1 = jnp.maximum(h1, 0.0)

    # Layer 2: same pattern.
    h2 = jnp.dot(h1, w2_ref[...], preferred_element_type=jnp.float32) + b2_ref[...]
    h2 = jnp.maximum(h2, 0.0)                                  # (tile_b, hidden2) f32

    # Layer 3 has a single output column: a full MXU pass would waste 127/128+ of the
    # array columns, so do it on the VPU (multiply) + XLU (lane reduce) instead.
    v = jnp.sum(h2 * w3_ref[...], axis=-1) + b3_ref[0, 0]      # (tile_b,)

    # Lane-dense store: tile_b on the lane axis of a (1, 1, tile_b) output block.
    o_ref[...] = v.reshape(o_ref.shape).astype(o_ref.dtype)


def critic_forward(state, params, *, max_tile_b=MAX_TILE_B):
    """state: (B, n_state) f32. params: dict of w1,b1,w2,b2,w3,b3. Returns (B, 1) f32."""
    B, n_state = state.shape
    w1, b1 = params["w1"], params["b1"]
    w2, b2 = params["w2"], params["b2"]
    w3, b3 = params["w3"], params["b3"]
    hidden1 = w1.shape[1]
    hidden2 = w2.shape[1]

    tile_b = _pick_tile_b(B, max_tile_b)
    num_tiles = pl.cdiv(B, tile_b)
    Bp = num_tiles * tile_b

    # Final-layer weight as a (1, hidden2) row (pure reshape, 32 floats); b3 as (1,1) scalar.
    w3_row = w3.reshape(1, hidden2)
    b3_sc = b3.reshape(1, 1)

    out = pl.pallas_call(
        critic_kernel,
        out_shape=jax.ShapeDtypeStruct((num_tiles, 1, tile_b), jnp.float32),
        grid=(num_tiles,),
        in_specs=[
            pl.BlockSpec((tile_b, n_state), lambda i: (i, 0)),      # x tile (varies; ragged
                                                                    # last block handled by
                                                                    # Pallas padding)
            pl.BlockSpec((n_state, hidden1), lambda i: (0, 0)),     # w1 (resident)
            pl.BlockSpec((1, hidden1), lambda i: (0, 0)),           # b1 (resident)
            pl.BlockSpec((hidden1, hidden2), lambda i: (0, 0)),     # w2 (resident)
            pl.BlockSpec((1, hidden2), lambda i: (0, 0)),           # b2 (resident)
            pl.BlockSpec((1, hidden2), lambda i: (0, 0)),           # w3 row (resident)
            pl.BlockSpec(memory_space=pltpu.MemorySpace.SMEM),      # b3 scalar in SMEM
        ],
        out_specs=pl.BlockSpec((1, 1, tile_b), lambda i: (i, 0, 0)),
        compiler_params=pltpu.CompilerParams(
            dimension_semantics=("parallel",),                      # megacore on v7x
        ),
    )(state, w1, b1, w2, b2, w3_row, b3_sc)

    # Rows >= B (from the ragged last block) are garbage and sliced off here.
    return out.reshape(Bp, 1)[:B]


def init_params(key, n_state, hidden1, hidden2):
    """Deterministic init mimicking PyTorch nn.Linear default (U[-1/sqrt(fan_in), +])."""
    ks = jax.random.split(key, 6)

    def linear(kw, kb, fan_in, fan_out):
        bound = 1.0 / jnp.sqrt(fan_in)
        w = jax.random.uniform(kw, (fan_in, fan_out), jnp.float32, -bound, bound)
        b = jax.random.uniform(kb, (1, fan_out), jnp.float32, -bound, bound)
        return w, b

    w1, b1 = linear(ks[0], ks[1], n_state, hidden1)
    w2, b2 = linear(ks[2], ks[3], hidden1, hidden2)
    w3, b3 = linear(ks[4], ks[5], hidden2, 1)
    return dict(w1=w1, b1=b1, w2=w2, b2=b2, w3=w3, b3=b3)


def critic_reference_f32(state, p):
    """Full-precision f32 reference (matmuls forced to HIGHEST so XLA doesn't downcast)."""
    hp = jax.lax.Precision.HIGHEST
    h1 = jnp.maximum(jnp.dot(state, p["w1"], precision=hp) + p["b1"], 0.0)
    h2 = jnp.maximum(jnp.dot(h1, p["w2"], precision=hp) + p["b2"], 0.0)
    return jnp.dot(h2, p["w3"], precision=hp) + p["b3"]


if __name__ == "__main__":
    key = jax.random.PRNGKey(0)
    k_param, k_state = jax.random.split(key)

    # Small shapes consistent with the module; B is deliberately not a multiple of 128 so
    # the ragged-last-block path is exercised, and > 128 so the grid has 2 steps.
    B, n_state, hidden1, hidden2 = 200, 16, 64, 32
    params = init_params(k_param, n_state, hidden1, hidden2)
    state = jax.random.normal(k_state, (B, n_state), jnp.float32)

    out = jax.block_until_ready(critic_forward(state, params))
    ref = critic_reference_f32(state, params)

    assert out.shape == (B, 1), out.shape
    assert jnp.allclose(out, ref, atol=2e-2, rtol=2e-2), "mismatch vs f32 reference"

    print("KERNEL_OK")
</pallas_src>

<mosaic_0001>
module attributes {stable_mosaic.version = 11 : i64} {
  func.func @critic_kernel(%arg0: i32, %arg1: memref<128x16xf32, #tpu.memory_space<vmem>>, %arg2: memref<16x64xf32, #tpu.memory_space<vmem>>, %arg3: memref<1x64xf32, #tpu.memory_space<vmem>>, %arg4: memref<64x32xf32, #tpu.memory_space<vmem>>, %arg5: memref<1x32xf32, #tpu.memory_space<vmem>>, %arg6: memref<1x32xf32, #tpu.memory_space<vmem>>, %arg7: memref<1x1xf32, #tpu.memory_space<smem>>, %arg8: memref<1x1x128xf32, #tpu.memory_space<vmem>>) attributes {dimension_semantics = [#tpu.dimension_semantics<parallel>], iteration_bounds = array<i64: 2>, scalar_prefetch = 0 : i64, scratch_operands = 0 : i64, tpu.core_type = #tpu.core_type<tc>, window_params = [{transform_indices = @transform_0, window_bounds = array<i64: 128, 16>}, {pipeline_mode = #tpu.pipeline_mode<synchronous>, transform_indices = @transform_1, window_bounds = array<i64: 16, 64>}, {pipeline_mode = #tpu.pipeline_mode<synchronous>, transform_indices = @transform_2, window_bounds = array<i64: 1, 64>}, {pipeline_mode = #tpu.pipeline_mode<synchronous>, transform_indices = @transform_3, window_bounds = array<i64: 64, 32>}, {pipeline_mode = #tpu.pipeline_mode<synchronous>, transform_indices = @transform_4, window_bounds = array<i64: 1, 32>}, {pipeline_mode = #tpu.pipeline_mode<synchronous>, transform_indices = @transform_5, window_bounds = array<i64: 1, 32>}, {transform_indices = @transform_6, window_bounds = array<i64: 1, 1>}, {transform_indices = @transform_7, window_bounds = array<i64: 1, 1, 128>}]} {
    %c0 = arith.constant 0 : index
    %c0_0 = arith.constant 0 : index
    %0 = vector.load %arg1[%c0, %c0_0] : memref<128x16xf32, #tpu.memory_space<vmem>>, vector<128x16xf32>
    %c0_1 = arith.constant 0 : index
    %c0_2 = arith.constant 0 : index
    %1 = vector.load %arg2[%c0_1, %c0_2] : memref<16x64xf32, #tpu.memory_space<vmem>>, vector<16x64xf32>
    %cst = arith.constant dense<0.000000e+00> : vector<128x64xf32>
    %2 = tpu.matmul %0, %1, %cst {dimension_numbers = #tpu.dot_dimension_numbers<[1], [0], [0], [1], [0, 0, 1, 1], [], []>} : vector<128x16xf32>, vector<16x64xf32>, vector<128x64xf32> -> vector<128x64xf32>
    %c0_3 = arith.constant 0 : index
    %c0_4 = arith.constant 0 : index
    %3 = vector.load %arg3[%c0_3, %c0_4] : memref<1x64xf32, #tpu.memory_space<vmem>>, vector<1x64xf32>
    %4 = vector.broadcast %3 : vector<1x64xf32> to vector<128x64xf32>
    %5 = arith.addf %2, %4 : vector<128x64xf32>
    %cst_5 = arith.constant 0.000000e+00 : f32
    %6 = vector.broadcast %cst_5 : f32 to vector<128x64xf32>
    %7 = arith.maximumf %5, %6 : vector<128x64xf32>
    %c0_6 = arith.constant 0 : index
    %c0_7 = arith.constant 0 : index
    %8 = vector.load %arg4[%c0_6, %c0_7] : memref<64x32xf32, #tpu.memory_space<vmem>>, vector<64x32xf32>
    %cst_8 = arith.constant dense<0.000000e+00> : vector<128x32xf32>
    %9 = tpu.matmul %7, %8, %cst_8 {dimension_numbers = #tpu.dot_dimension_numbers<[1], [0], [0], [1], [0, 0, 1, 1], [], []>} : vector<128x64xf32>, vector<64x32xf32>, vector<128x32xf32> -> vector<128x32xf32>
    %c0_9 = arith.constant 0 : index
    %c0_10 = arith.constant 0 : index
    %10 = vector.load %arg5[%c0_9, %c0_10] : memref<1x32xf32, #tpu.memory_space<vmem>>, vector<1x32xf32>
    %11 = vector.broadcast %10 : vector<1x32xf32> to vector<128x32xf32>
    %12 = arith.addf %9, %11 : vector<128x32xf32>
    %cst_11 = arith.constant 0.000000e+00 : f32
    %13 = vector.broadcast %cst_11 : f32 to vector<128x32xf32>
    %14 = arith.maximumf %12, %13 : vector<128x32xf32>
    %c0_12 = arith.constant 0 : index
    %c0_13 = arith.constant 0 : index
    %15 = vector.load %arg6[%c0_12, %c0_13] : memref<1x32xf32, #tpu.memory_space<vmem>>, vector<1x32xf32>
    %16 = vector.broadcast %15 : vector<1x32xf32> to vector<128x32xf32>
    %17 = arith.mulf %14, %16 : vector<128x32xf32>
    %cst_14 = arith.constant dense<0.000000e+00> : vector<128xf32>
    %18 = vector.multi_reduction <add>, %17, %cst_14 [1] : vector<128x32xf32> to vector<128xf32>
    %c0_15 = arith.constant 0 : index
    %c0_16 = arith.constant 0 : index
    %19 = memref.load %arg7[%c0_15, %c0_16] : memref<1x1xf32, #tpu.memory_space<smem>>
    %20 = vector.broadcast %19 : f32 to vector<128xf32>
    %21 = arith.addf %18, %20 : vector<128xf32>
    %22 = vector.shape_cast %21 : vector<128xf32> to vector<1x1x128xf32>
    %c0_17 = arith.constant 0 : index
    %c0_18 = arith.constant 0 : index
    %c0_19 = arith.constant 0 : index
    %23 = vector.load %arg8[%c0_17, %c0_18, %c0_19] : memref<1x1x128xf32, #tpu.memory_space<vmem>>, vector<1x1x128xf32>
    tpu.vector_store %arg8[%c0_17, %c0_18, %c0_19], %22 {strides = array<i32>} : memref<1x1x128xf32, #tpu.memory_space<vmem>>, vector<1x1x128xf32>,
    return
  }
  func.func @transform_0(%arg0: i32) -> (i32, i32) {
    %c0_i32 = arith.constant 0 : i32
    %c0_i32_0 = arith.constant 0 : i32
    return %arg0, %c0_i32 : i32, i32
  }
  func.func @transform_1(%arg0: i32) -> (i32, i32) {
    %c0_i32 = arith.constant 0 : i32
    %c0_i32_0 = arith.constant 0 : i32
    %c0_i32_1 = arith.constant 0 : i32
    return %c0_i32, %c0_i32_0 : i32, i32
  }
  func.func @transform_2(%arg0: i32) -> (i32, i32) {
    %c0_i32 = arith.constant 0 : i32
    %c0_i32_0 = arith.constant 0 : i32
    %c0_i32_1 = arith.constant 0 : i32
    return %c0_i32, %c0_i32_0 : i32, i32
  }
  func.func @transform_3(%arg0: i32) -> (i32, i32) {
    %c0_i32 = arith.constant 0 : i32
    %c0_i32_0 = arith.constant 0 : i32
    %c0_i32_1 = arith.constant 0 : i32
    return %c0_i32, %c0_i32_0 : i32, i32
  }
  func.func @transform_4(%arg0: i32) -> (i32, i32) {
    %c0_i32 = arith.constant 0 : i32
    %c0_i32_0 = arith.constant 0 : i32
    %c0_i32_1 = arith.constant 0 : i32
    return %c0_i32, %c0_i32_0 : i32, i32
  }
  func.func @transform_5(%arg0: i32) -> (i32, i32) {
    %c0_i32 = arith.constant 0 : i32
    %c0_i32_0 = arith.constant 0 : i32
    %c0_i32_1 = arith.constant 0 : i32
    return %c0_i32, %c0_i32_0 : i32, i32
  }
  func.func @transform_6(%arg0: i32) -> (i32, i32) {
    %c0_i32 = arith.constant 0 : i32
    %c0_i32_0 = arith.constant 0 : i32
    %c0_i32_1 = arith.constant 0 : i32
    return %c0_i32, %c0_i32_0 : i32, i32
  }
  func.func @transform_7(%arg0: i32) -> (i32, i32, i32) {
    %c0_i32 = arith.constant 0 : i32
    %c0_i32_0 = arith.constant 0 : i32
    %c0_i32_1 = arith.constant 0 : i32
    return %arg0, %c0_i32, %c0_i32_0 : i32, i32, i32
  }
}

</mosaic_0001>

<llo_original>
// kernel: tpu_custom_call.1
$region0: #{tpu_custom_call.1}
  #allocation0 [shape = 'u32[]', space=smem, size = 0x4, offset = 0x4, fixed_abs, tag = 'smem constant byte address 0x4 - core index']
  #allocation1 [shape = 'u32[144,128]{1,0:T(1,128)}', space=vmem, size = 0x12000, scoped, tag = 'internal scratch']
  #allocation2 [shape = 'f32[1,1]{1,0:T(1,128)S(6)}', space=smem, size = 0x200, scoped, tag = 'scoped memory for tpu_custom_call.1']
  %s0 = inlined_call_operand.vmem [shape: f32[200,16], index: 0, kind: input, shape index: {}]
  %s1 = inlined_call_operand.vmem [shape: f32[16,64], index: 1, kind: input, shape index: {}]
  %s2 = inlined_call_operand.vmem [shape: f32[1,64], index: 2, kind: input, shape index: {}]
  %s3 = inlined_call_operand.vmem [shape: f32[64,32], index: 3, kind: input, shape index: {}]
  %s4 = inlined_call_operand.vmem [shape: f32[1,32], index: 4, kind: input, shape index: {}]
  %s5 = inlined_call_operand.vmem [shape: f32[1,32], index: 5, kind: input, shape index: {}]
  %s6 = inlined_call_operand.<no memory space> [shape: f32[1,1], index: 6, kind: input, shape index: {}]
  %s7 = inlined_call_operand.hbm [shape: f32[2,1,128], index: 7, kind: output, shape index: {}]
  %s8 = sld [smem:[#allocation0]]
  $region61: #{tpu_custom_call.1} parent=0
    _
  %s10 = ssub.s32 1, %s8
  %s11 = scalar_select 0, %s10, %s8
  %12 = sst [smem:[#allocation2]] %s6
  $region1: #{tpu_custom_call.1} parent=0
    #allocation3 [shape = 'u8[1024]{0}', space=vmem, size = 0x400, scoped, tag = 'output window, operand 0']
    #allocation4 [shape = 's32[2]{0}', space=sflag, size = 0x8, scoped, tag = 'scoped memory for tpu_custom_call.1']
    %13 = vsyncpa [#allocation4], 0
    %s14 = scalar_lea.sflag [#allocation4], 1
    %15 = vsyncpa %s14, 0
    loop: start=0, step=1, limit=4
    $region2: #{tpu_custom_call.1} parent=1 // loop_pre_header
      _
    $region3: #{tpu_custom_call.1} parent=1 // loop_header
      %s17 = sphi 0, %s21
      %p18 = scmp.ge.s32.totalorder %s17, 4
      %s27 = sphi 0, %s29
      %s30 = sphi 0, %s27
      %s31 = sphi 0, %s30
      %s47 = sphi 0, %s31
      %s51 = sphi 0, %s51
      %s53 = sphi 0, %s51
      %s54 = sphi 0, %s53
      %s68 = sphi 0, %s54
      %s72 = sphi 0, %s72
      %s74 = sphi 0, %s72
      %s75 = sphi 0, %s74
      %s89 = sphi 0, %s75
      %s93 = sphi 0, %s93
      %s95 = sphi 0, %s93
      %s96 = sphi 0, %s95
      %s110 = sphi 0, %s96
      %s114 = sphi 0, %s114
      %s116 = sphi 0, %s114
      %s117 = sphi 0, %s116
      %s131 = sphi 0, %s117
      %s135 = sphi 0, %s135
      %s137 = sphi 0, %s135
      %s138 = sphi 0, %s137
      %s152 = sphi 0, %s138
      %s156 = sphi 0, %s156
      %s158 = sphi 0, %s156
      %s159 = sphi 0, %s158
      %s173 = sphi 0, %s159
      %s179 = sphi 0, %s181
      %s182 = sphi 0, %s179
      %s183 = sphi 0, %s182
      %s199 = sphi 0, %s183
    $region4: #{tpu_custom_call.1} parent=1 // loop_header_branch
      %20 = sbr.rel (%p18) target = $region8
    $region5: #{tpu_custom_call.1} parent=1 // loop_body
      %s22 = ssub.s32 %s17, 1
      %s23 = ssub.s32 %s17, 2
      %s24 = sadd.s32 %s17, 1
      %s25 = ssub.s32 %s17, %s24
      %p26 = scmp.eq.s32.totalorder %s25, 0
      %s28 = sadd.s32 %s27, 1
      %s29 = scalar_select %p26, %s27, %s28
      %p32 = pneg %p26
      %p33 = scmp.eq.s32.totalorder %s17, 1
      %p34 = por %p32, %p33
      %p35 = scmp.ne.s32.totalorder %s27, %s30
      %p36 = scmp.eq.s32.totalorder %s17, 0
      %p37 = por %p35, %p36
      %p38 = scmp.ne.s32.totalorder %s27, %s30
      %p39 = scmp.eq.s32.totalorder %s22, 1
      %p40 = por %p38, %p39
      %p41 = scmp.ne.s32.totalorder %s30, %s31
      %p42 = scmp.eq.s32.totalorder %s22, 0
      %p43 = por %p41, %p42
      %p44 = scmp.ne.s32.totalorder %s30, %s31
      %p45 = scmp.eq.s32.totalorder %s23, 1
      %p46 = por %p44, %p45
      %p48 = scmp.ne.s32.totalorder %s31, %s47
      %p49 = scmp.eq.s32.totalorder %s23, 0
      %p50 = por %p48, %p49
      %s52 = sadd.s32 %s51, 1
      %p55 = scmp.eq.s32.totalorder %s17, 1
      %p56 = scmp.ne.s32.totalorder %s51, %s53
      %p57 = scmp.eq.s32.totalorder %s17, 0
      %p58 = por %p56, %p57
      %p59 = scmp.ne.s32.totalorder %s51, %s53
      %p60 = scmp.eq.s32.totalorder %s22, 1
      %p61 = por %p59, %p60
      %p62 = scmp.ne.s32.totalorder %s53, %s54
      %p63 = scmp.eq.s32.totalorder %s22, 0
      %p64 = por %p62, %p63
      %p65 = scmp.ne.s32.totalorder %s53, %s54
      %p66 = scmp.eq.s32.totalorder %s23, 1
      %p67 = por %p65, %p66
      %p69 = scmp.ne.s32.totalorder %s54, %s68
      %p70 = scmp.eq.s32.totalorder %s23, 0
      %p71 = por %p69, %p70
      %s73 = sadd.s32 %s72, 1
      %p76 = scmp.eq.s32.totalorder %s17, 1
      %p77 = scmp.ne.s32.totalorder %s72, %s74
      %p78 = scmp.eq.s32.totalorder %s17, 0
      %p79 = por %p77, %p78
      %p80 = scmp.ne.s32.totalorder %s72, %s74
      %p81 = scmp.eq.s32.totalorder %s22, 1
      %p82 = por %p80, %p81
      %p83 = scmp.ne.s32.totalorder %s74, %s75
      %p84 = scmp.eq.s32.totalorder %s22, 0
      %p85 = por %p83, %p84
      %p86 = scmp.ne.s32.totalorder %s74, %s75
      %p87 = scmp.eq.s32.totalorder %s23, 1
      %p88 = por %p86, %p87
      %p90 = scmp.ne.s32.totalorder %s75, %s89
      %p91 = scmp.eq.s32.totalorder %s23, 0
      %p92 = por %p90, %p91
      %s94 = sadd.s32 %s93, 1
      %p97 = scmp.eq.s32.totalorder %s17, 1
      %p98 = scmp.ne.s32.totalorder %s93, %s95
      %p99 = scmp.eq.s32.totalorder %s17, 0
      %p100 = por %p98, %p99
      %p101 = scmp.ne.s32.totalorder %s93, %s95
      %p102 = scmp.eq.s32.totalorder %s22, 1
      %p103 = por %p101, %p102
      %p104 = scmp.ne.s32.totalorder %s95, %s96
      %p105 = scmp.eq.s32.totalorder %s22, 0
      %p106 = por %p104, %p105
      %p107 = scmp.ne.s32.totalorder %s95, %s96
      %p108 = scmp.eq.s32.totalorder %s23, 1
      %p109 = por %p107, %p108
      %p111 = scmp.ne.s32.totalorder %s96, %s110
      %p112 = scmp.eq.s32.totalorder %s23, 0
      %p113 = por %p111, %p112
      %s115 = sadd.s32 %s114, 1
      %p118 = scmp.eq.s32.totalorder %s17, 1
      %p119 = scmp.ne.s32.totalorder %s114, %s116
      %p120 = scmp.eq.s32.totalorder %s17, 0
      %p121 = por %p119, %p120
      %p122 = scmp.ne.s32.totalorder %s114, %s116
      %p123 = scmp.eq.s32.totalorder %s22, 1
      %p124 = por %p122, %p123
      %p125 = scmp.ne.s32.totalorder %s116, %s117
      %p126 = scmp.eq.s32.totalorder %s22, 0
      %p127 = por %p125, %p126
      %p128 = scmp.ne.s32.totalorder %s116, %s117
      %p129 = scmp.eq.s32.totalorder %s23, 1
      %p130 = por %p128, %p129
      %p132 = scmp.ne.s32.totalorder %s117, %s131
      %p133 = scmp.eq.s32.totalorder %s23, 0
      %p134 = por %p132, %p133
      %s136 = sadd.s32 %s135, 1
      %p139 = scmp.eq.s32.totalorder %s17, 1
      %p140 = scmp.ne.s32.totalorder %s135, %s137
      %p141 = scmp.eq.s32.totalorder %s17, 0
      %p142 = por %p140, %p141
      %p143 = scmp.ne.s32.totalorder %s135, %s137
      %p144 = scmp.eq.s32.totalorder %s22, 1
      %p145 = por %p143, %p144
      %p146 = scmp.ne.s32.totalorder %s137, %s138
      %p147 = scmp.eq.s32.totalorder %s22, 0
      %p148 = por %p146, %p147
      %p149 = scmp.ne.s32.totalorder %s137, %s138
      %p150 = scmp.eq.s32.totalorder %s23, 1
      %p151 = por %p149, %p150
      %p153 = scmp.ne.s32.totalorder %s138, %s152
      %p154 = scmp.eq.s32.totalorder %s23, 0
      %p155 = por %p153, %p154
      %s157 = sadd.s32 %s156, 1
      %p160 = scmp.eq.s32.totalorder %s17, 1
      %p161 = scmp.ne.s32.totalorder %s156, %s158
      %p162 = scmp.eq.s32.totalorder %s17, 0
      %p163 = por %p161, %p162
      %p164 = scmp.ne.s32.totalorder %s156, %s158
      %p165 = scmp.eq.s32.totalorder %s22, 1
      %p166 = por %p164, %p165
      %p167 = scmp.ne.s32.totalorder %s158, %s159
      %p168 = scmp.eq.s32.totalorder %s22, 0
      %p169 = por %p167, %p168
      %p170 = scmp.ne.s32.totalorder %s158, %s159
      %p171 = scmp.eq.s32.totalorder %s23, 1
      %p172 = por %p170, %p171
      %p174 = scmp.ne.s32.totalorder %s159, %s173
      %p175 = scmp.eq.s32.totalorder %s23, 0
      %p176 = por %p174, %p175
      %s177 = ssub.s32 %s17, %s24
      %p178 = scmp.eq.s32.totalorder %s177, 0
      %s180 = sadd.s32 %s179, 1
      %s181 = scalar_select %p178, %s179, %s180
      %p184 = pneg %p178
      %p185 = scmp.eq.s32.totalorder %s17, 1
      %p186 = por %p184, %p185
      %p187 = scmp.ne.s32.totalorder %s179, %s182
      %p188 = scmp.eq.s32.totalorder %s17, 0
      %p189 = por %p187, %p188
      %p190 = scmp.ne.s32.totalorder %s179, %s182
      %p191 = scmp.eq.s32.totalorder %s22, 1
      %p192 = por %p190, %p191
      %p193 = scmp.ne.s32.totalorder %s182, %s183
      %p194 = scmp.eq.s32.totalorder %s22, 0
      %p195 = por %p193, %p194
      %p196 = scmp.ne.s32.totalorder %s182, %s183
      %p197 = scmp.eq.s32.totalorder %s23, 1
      %p198 = por %p196, %p197
      %p200 = scmp.ne.s32.totalorder %s183, %s199
      %p201 = scmp.eq.s32.totalorder %s23, 0
      %p202 = por %p200, %p201
      %p203 = scmp.le.s32.totalorder 1, %s17
      %p204 = scmp.lt.s32.totalorder %s17, 3
      %p205 = pnand %p203, %p204
      %p206 = pneg %p205
      // Predicated region
      $region9: #{tpu_custom_call.1} parent=5 // pred_check
        _
      $region10: #{tpu_custom_call.1} parent=5 // pred_check_branch
        %208 = sbr.rel (%p205) target = $region12
      $region11: #{tpu_custom_call.1} parent=5 // pred_region
        %s209 = ssub.s32 %s17, 1
        // Predicated region
        $region13: #{tpu_custom_call.1} parent=11 // pred_check
          %p210 = pneg %p64
        $region14: #{tpu_custom_call.1} parent=11 // pred_check_branch
          %212 = sbr.rel (%p210) target = $region16
        $region15: #{tpu_custom_call.1} parent=11 // pred_region
          _
        $region16: #{tpu_custom_call.1} parent=11 // pred_fallthru
          _
        // Predicated region
        $region17: #{tpu_custom_call.1} parent=11 // pred_check
          %p213 = pneg %p85
        $region18: #{tpu_custom_call.1} parent=11 // pred_check_branch
          %215 = sbr.rel (%p213) target = $region20
        $region19: #{tpu_custom_call.1} parent=11 // pred_region
          _
        $region20: #{tpu_custom_call.1} parent=11 // pred_fallthru
          _
        // Predicated region
        $region21: #{tpu_custom_call.1} parent=11 // pred_check
          %p216 = pneg %p106
        $region22: #{tpu_custom_call.1} parent=11 // pred_check_branch
          %218 = sbr.rel (%p216) target = $region24
        $region23: #{tpu_custom_call.1} parent=11 // pred_region
          _
        $region24: #{tpu_custom_call.1} parent=11 // pred_fallthru
          _
        // Predicated region
        $region25: #{tpu_custom_call.1} parent=11 // pred_check
          %p219 = pneg %p127
        $region26: #{tpu_custom_call.1} parent=11 // pred_check_branch
          %221 = sbr.rel (%p219) target = $region28
        $region27: #{tpu_custom_call.1} parent=11 // pred_region
          _
        $region28: #{tpu_custom_call.1} parent=11 // pred_fallthru
          _
        // Predicated region
        $region29: #{tpu_custom_call.1} parent=11 // pred_check
          %p222 = pneg %p148
        $region30: #{tpu_custom_call.1} parent=11 // pred_check_branch
          %224 = sbr.rel (%p222) target = $region32
        $region31: #{tpu_custom_call.1} parent=11 // pred_region
          _
        $region32: #{tpu_custom_call.1} parent=11 // pred_fallthru
          _
        // Predicated region
        $region33: #{tpu_custom_call.1} parent=11 // pred_check
          %p225 = pneg %p169
        $region34: #{tpu_custom_call.1} parent=11 // pred_check_branch
          %227 = sbr.rel (%p225) target = $region36
        $region35: #{tpu_custom_call.1} parent=11 // pred_region
          _
        $region36: #{tpu_custom_call.1} parent=11 // pred_fallthru
          _
      $region12: #{tpu_custom_call.1} parent=5 // pred_fallthru
        _
      %p228 = scmp.lt.s32.totalorder %s17, 2
      // Predicated region
      $region37: #{tpu_custom_call.1} parent=5 // pred_check
        %p229 = pneg %p228
      $region38: #{tpu_custom_call.1} parent=5 // pred_check_branch
        %231 = sbr.rel (%p229) target = $region40
      $region39: #{tpu_custom_call.1} parent=5 // pred_region
        // Predicated region
        $region41: #{tpu_custom_call.1} parent=39 // pred_check
          %p232 = pneg %p37
        $region42: #{tpu_custom_call.1} parent=39 // pred_check_branch
          %234 = sbr.rel (%p232) target = $region44
        $region43: #{tpu_custom_call.1} parent=39 // pred_region
          %s235 = smul.u32 16, %s17
          %s236 = ssub.s32 25, %s235
          %p237 = scmp.lt.s32.totalorder %s236, 16
          %s238 = scalar_select %p237, %s236, 16
          %s239 = smul.u32 128, %s238
          %p240 = scmp.lt.s32.totalorder %s235, 24
          %s241 = scalar_select %p240, %s235, 24
          %s242 = smul.addr %s241, 8
          %s243 = scalar_lea.vmem %s0, %s242
          %s244 = smul.u32 16, %s17
          %s245 = ssub.s32 25, %s244
          %p246 = scmp.lt.s32.totalorder %s245, 16
          %s247 = scalar_select %p246, %s245, 16
          %s248 = smul.u32 128, %s247
        $region44: #{tpu_custom_call.1} parent=39 // pred_fallthru
          _
      $region40: #{tpu_custom_call.1} parent=5 // pred_fallthru
        _
      %p249 = scmp.le.s32.totalorder 1, %s17
      %p250 = scmp.lt.s32.totalorder %s17, 3
      %p251 = pnand %p249, %p250
      %p252 = pneg %p251
      // Predicated region
      $region45: #{tpu_custom_call.1} parent=5 // pred_check
        _
      $region46: #{tpu_custom_call.1} parent=5 // pred_check_branch
        %254 = sbr.rel (%p251) target = $region48
      $region47: #{tpu_custom_call.1} parent=5 // pred_region
        %s255 = ssub.s32 %s17, 1
        %s256 = smul.u32 16, %s22
        %s257 = ssub.s32 25, %s256
        %p258 = scmp.lt.s32.totalorder %s257, 16
        %s259 = scalar_select %p258, %s257, 16
        %s260 = smul.u32 128, %s259
        %p261 = scmp.lt.s32.totalorder %s256, 24
        %s262 = scalar_select %p261, %s256, 24
        %s263 = smul.addr %s262, 8
        %s264 = scalar_lea.vmem %s0, %s263
        %p265 = pneg %p43
        %p266 = pneg %p40
        %p267 = pneg %p64
        %p268 = pneg %p61
        %p269 = pneg %p85
        %p270 = pneg %p82
        %p271 = pneg %p106
        %p272 = pneg %p103
        %p273 = pneg %p127
        %p274 = pneg %p124
        %p275 = pneg %p148
        %p276 = pneg %p145
        %p277 = pneg %p169
        %p278 = pneg %p166
        %p279 = pneg %p195
        %p280 = pneg %p192
        %s281 = sand.u32 %s182, 1
        %s282 = scalar_lea.sflag [#allocation4], %s281
        %s283 = sand.u32 %s182, 1
        %s284 = scalar_lea.vmem [#allocation3], %s283
        %s285 = smul.u32 16, %s22
        %s286 = ssub.s32 25, %s285
        %p287 = scmp.lt.s32.totalorder %s286, 16
        %s288 = scalar_select %p287, %s286, 16
        %s289 = smul.u32 128, %s288
        %p290 = scmp.lt.s32.totalorder %s285, 24
        %s291 = scalar_select %p290, %s285, 24
        %s292 = smul.addr %s291, 8
        %s293 = scalar_lea.vmem %s0, %s292
        %s294 = smul.u32 16, %s22
        %s295 = ssub.s32 25, %s294
        %p296 = scmp.lt.s32.totalorder %s295, 16
        %s297 = scalar_select %p296, %s295, 16
        %s298 = smul.u32 128, %s297
        %v299 = vld [vmem:[%s293] sm:$0xff]
        %v300 = vld [vmem:[%s293 + $0x8] sm:$0xff]
        %v301 = vld [vmem:[%s293 + $0x10] sm:$0xff]
        %v302 = vld [vmem:[%s293 + $0x18] sm:$0xff]
        %v303 = vld [vmem:[%s293 + $0x20] sm:$0xff]
        %v304 = vld [vmem:[%s293 + $0x28] sm:$0xff]
        %v305 = vld [vmem:[%s293 + $0x30] sm:$0xff]
        %v306 = vld [vmem:[%s293 + $0x38] sm:$0xff]
        %v307 = vld [vmem:[%s293 + $0x40] sm:$0xff]
        %v308 = vld [vmem:[%s293 + $0x48] sm:$0xff]
        %v309 = vld [vmem:[%s293 + $0x50] sm:$0xff]
        %v310 = vld [vmem:[%s293 + $0x58] sm:$0xff]
        %v311 = vld [vmem:[%s293 + $0x60] sm:$0xff]
        %v312 = vld [vmem:[%s293 + $0x68] sm:$0xff]
        %v313 = vld [vmem:[%s293 + $0x70] sm:$0xff]
        %v314 = vld [vmem:[%s293 + $0x78] sm:$0xff]
        %v315 = vld [vmem:[%s1] sm:$0xff]
        %v316 = vld [vmem:[%s1 + $0x8] sm:$0xff]
        %v317 = vld [vmem:[%s2] sm:$0x1]
        %v319 = vlaneseq
        %v320 = vshrl.u32 %v319, 7
        %v321 = vsub.s32 0, %v320
        %v322 = vrot.slane %v317, %v321
        %vm324 = vcmask 130048
        %v326 = vsel %vm324, %v299, 0
        %v329 = vsel %vm324, %v300, 0
        %v332 = vsel %vm324, %v301, 0
        %v335 = vsel %vm324, %v302, 0
        %v338 = vsel %vm324, %v303, 0
        %v341 = vsel %vm324, %v304, 0
        %v344 = vsel %vm324, %v305, 0
        %v347 = vsel %vm324, %v306, 0
        %v350 = vsel %vm324, %v307, 0
        %v353 = vsel %vm324, %v308, 0
        %v356 = vsel %vm324, %v309, 0
        %v359 = vsel %vm324, %v310, 0
        %v362 = vsel %vm324, %v311, 0
        %v365 = vsel %vm324, %v312, 0
        %v368 = vsel %vm324, %v313, 0
        %v371 = vsel %vm324, %v314, 0
        %373 = vmatprep.subr.mxu0 0.0
        %374 = vmatpush1.msra.mxu0 0.0
        %375 = vmatprep.subr.mxu0 0.0
        %376 = vmatpush1.msra.mxu0 0.0
        %377 = vmatprep.subr.mxu0 0.0
        %378 = vmatpush1.msra.mxu0 0.0
        %379 = vmatprep.subr.mxu0 0.0
        %380 = vmatpush1.msra.mxu0 0.0
        %381 = vmatprep.subr.mxu0 0.0
        %382 = vmatpush1.msra.mxu0 0.0
        %383 = vmatprep.subr.mxu0 0.0
        %384 = vmatpush1.msra.mxu0 0.0
        %385 = vmatprep.subr.mxu0 0.0
        %386 = vmatpush1.msra.mxu0 0.0
        %387 = vmatprep.subr.mxu0 0.0
        %388 = vmatpush1.msra.mxu0 0.0
        %389 = vmatprep.subr.mxu0 0.0
        %390 = vmatpush1.msra.mxu0 0.0
        %391 = vmatprep.subr.mxu0 0.0
        %392 = vmatpush1.msra.mxu0 0.0
        %393 = vmatprep.subr.mxu0 0.0
        %394 = vmatpush1.msra.mxu0 0.0
        %395 = vmatprep.subr.mxu0 0.0
        %396 = vmatpush1.msra.mxu0 0.0
        %397 = vmatprep.subr.mxu0 0.0
        %398 = vmatpush1.msra.mxu0 0.0
        %399 = vmatprep.subr.mxu0 0.0
        %400 = vmatpush1.msra.mxu0 0.0
        %401 = vmatprep.subr.mxu0 0.0
        %402 = vmatpush1.msra.mxu0 %v316
        %403 = vmatprep.subr.mxu0 0.0
        %404 = vmatpush1.msra.mxu0 %v315
        %405 = vmatprep.subr.mxu0 0.0
        %406 = vmatpush2.msra.mxu0 0.0
        %407 = vmatprep.subr.mxu0 0.0
        %408 = vmatpush2.msra.mxu0 0.0
        %409 = vmatprep.subr.mxu0 0.0
        %410 = vmatpush2.msra.mxu0 0.0
        %411 = vmatprep.subr.mxu0 0.0
        %412 = vmatpush2.msra.mxu0 0.0
        %413 = vmatprep.subr.mxu0 0.0
        %414 = vmatpush2.msra.mxu0 0.0
        %415 = vmatprep.subr.mxu0 0.0
        %416 = vmatpush2.msra.mxu0 0.0
        %417 = vmatprep.subr.mxu0 0.0
        %418 = vmatpush2.msra.mxu0 0.0
        %419 = vmatprep.subr.mxu0 0.0
        %420 = vmatpush2.msra.mxu0 0.0
        %421 = vmatprep.subr.mxu0 0.0
        %422 = vmatpush2.msra.mxu0 0.0
        %423 = vmatprep.subr.mxu0 0.0
        %424 = vmatpush2.msra.mxu0 0.0
        %425 = vmatprep.subr.mxu0 0.0
        %426 = vmatpush2.msra.mxu0 0.0
        %427 = vmatprep.subr.mxu0 0.0
        %428 = vmatpush2.msra.mxu0 0.0
        %429 = vmatprep.subr.mxu0 0.0
        %430 = vmatpush2.msra.mxu0 0.0
        %431 = vmatprep.subr.mxu0 0.0
        %432 = vmatpush2.msra.mxu0 0.0
        %433 = vmatprep.subr.mxu0 0.0
        %434 = vmatpush2.msra.mxu0 0.0
        %435 = vmatprep.subr.mxu0 0.0
        %436 = vmatpush2.msra.mxu0 0.0
        %437 = vmatprep.mubr.f32.mxu0 0.0
        %438 = vmatmul.mubr.f32.gmra.mxu0 %v326
        %v439 = vpop.f32.mrf.mxu0
        %v440 = vadd.f32 %v322, %v439
        %v441 = vpop.f32.mrf.mxu0
        %442 = vmatprep.mubr.f32.mxu0 0.0
        %443 = vmatmul.mubr.f32.gmra.mxu0 %v329
        %v444 = vpop.f32.mrf.mxu0
        %v445 = vadd.f32 %v322, %v444
        %v446 = vpop.f32.mrf.mxu0
        %447 = vmatprep.mubr.f32.mxu0 0.0
        %448 = vmatmul.mubr.f32.gmra.mxu0 %v332
        %v449 = vpop.f32.mrf.mxu0
        %v450 = vadd.f32 %v322, %v449
        %v451 = vpop.f32.mrf.mxu0
        %452 = vmatprep.mubr.f32.mxu0 0.0
        %453 = vmatmul.mubr.f32.gmra.mxu0 %v335
        %v454 = vpop.f32.mrf.mxu0
        %v455 = vadd.f32 %v322, %v454
        %v456 = vpop.f32.mrf.mxu0
        %457 = vmatprep.mubr.f32.mxu0 0.0
        %458 = vmatmul.mubr.f32.gmra.mxu0 %v338
        %v459 = vpop.f32.mrf.mxu0
        %v460 = vadd.f32 %v322, %v459
        %v461 = vpop.f32.mrf.mxu0
        %462 = vmatprep.mubr.f32.mxu0 0.0
        %463 = vmatmul.mubr.f32.gmra.mxu0 %v341
        %v464 = vpop.f32.mrf.mxu0
        %v465 = vadd.f32 %v322, %v464
        %v466 = vpop.f32.mrf.mxu0
        %467 = vmatprep.mubr.f32.mxu0 0.0
        %468 = vmatmul.mubr.f32.gmra.mxu0 %v344
        %v469 = vpop.f32.mrf.mxu0
        %v470 = vadd.f32 %v322, %v469
        %v471 = vpop.f32.mrf.mxu0
        %472 = vmatprep.mubr.f32.mxu0 0.0
        %473 = vmatmul.mubr.f32.gmra.mxu0 %v347
        %v474 = vpop.f32.mrf.mxu0
        %v475 = vadd.f32 %v322, %v474
        %v476 = vpop.f32.mrf.mxu0
        %477 = vmatprep.mubr.f32.mxu0 0.0
        %478 = vmatmul.mubr.f32.gmra.mxu0 %v350
        %v479 = vpop.f32.mrf.mxu0
        %v480 = vadd.f32 %v322, %v479
        %v481 = vpop.f32.mrf.mxu0
        %482 = vmatprep.mubr.f32.mxu0 0.0
        %483 = vmatmul.mubr.f32.gmra.mxu0 %v353
        %v484 = vpop.f32.mrf.mxu0
        %v485 = vadd.f32 %v322, %v484
        %v486 = vpop.f32.mrf.mxu0
        %487 = vmatprep.mubr.f32.mxu0 0.0
        %488 = vmatmul.mubr.f32.gmra.mxu0 %v356
        %v489 = vpop.f32.mrf.mxu0
        %v490 = vadd.f32 %v322, %v489
        %v491 = vpop.f32.mrf.mxu0
        %492 = vmatprep.mubr.f32.mxu0 0.0
        %493 = vmatmul.mubr.f32.gmra.mxu0 %v359
        %v494 = vpop.f32.mrf.mxu0
        %v495 = vadd.f32 %v322, %v494
        %v496 = vpop.f32.mrf.mxu0
        %497 = vmatprep.mubr.f32.mxu0 0.0
        %498 = vmatmul.mubr.f32.gmra.mxu0 %v362
        %v499 = vpop.f32.mrf.mxu0
        %v500 = vadd.f32 %v322, %v499
        %v501 = vpop.f32.mrf.mxu0
        %502 = vmatprep.mubr.f32.mxu0 0.0
        %503 = vmatmul.mubr.f32.gmra.mxu0 %v365
        %v504 = vpop.f32.mrf.mxu0
        %v505 = vadd.f32 %v322, %v504
        %v506 = vpop.f32.mrf.mxu0
        %507 = vmatprep.mubr.f32.mxu0 0.0
        %508 = vmatmul.mubr.f32.gmra.mxu0 %v368
        %v509 = vpop.f32.mrf.mxu0
        %v510 = vadd.f32 %v322, %v509
        %v511 = vpop.f32.mrf.mxu0
        %512 = vmatprep.mubr.f32.mxu0 0.0
        %513 = vmatmul.mubr.f32.gmra.mxu0 %v371
        %v514 = vpop.f32.mrf.mxu0
        %v515 = vadd.f32 %v322, %v514
        %v516 = vpop.f32.mrf.mxu0
        %517 = vdwg.mxu0
        %v518 = vmax.f32 %v440, 0.0
        %v519 = vmax.f32 %v445, 0.0
        %v520 = vmax.f32 %v450, 0.0
        %v521 = vmax.f32 %v455, 0.0
        %v522 = vmax.f32 %v460, 0.0
        %v523 = vmax.f32 %v465, 0.0
        %v524 = vmax.f32 %v470, 0.0
        %v525 = vmax.f32 %v475, 0.0
        %v526 = vmax.f32 %v480, 0.0
        %v527 = vmax.f32 %v485, 0.0
        %v528 = vmax.f32 %v490, 0.0
        %v529 = vmax.f32 %v495, 0.0
        %v530 = vmax.f32 %v500, 0.0
        %v531 = vmax.f32 %v505, 0.0
        %v532 = vmax.f32 %v510, 0.0
        %v533 = vmax.f32 %v515, 0.0
        %v534 = vld [vmem:[%s3] sm:$0xff]
        %v535 = vld [vmem:[%s3 + $0x8] sm:$0xff]
        %v536 = vld [vmem:[%s3 + $0x10] sm:$0xff]
        %v537 = vld [vmem:[%s3 + $0x18] sm:$0xff]
        %v538 = vld [vmem:[%s3 + $0x20] sm:$0xff]
        %v539 = vld [vmem:[%s3 + $0x28] sm:$0xff]
        %v540 = vld [vmem:[%s3 + $0x30] sm:$0xff]
        %v541 = vld [vmem:[%s3 + $0x38] sm:$0xff]
        %v542 = vld [vmem:[%s4] sm:$0x1]
        %v544 = vlaneseq
        %v545 = vshrl.u32 %v544, 7
        %v546 = vsub.s32 0, %v545
        %v547 = vrot.slane %v542, %v546
        %vm549 = vcmask 523264
        %v551 = vsel %vm549, %v518, 0
        %v554 = vsel %vm549, %v519, 0
        %v557 = vsel %vm549, %v520, 0
        %v560 = vsel %vm549, %v521, 0
        %v563 = vsel %vm549, %v522, 0
        %v566 = vsel %vm549, %v523, 0
        %v569 = vsel %vm549, %v524, 0
        %v572 = vsel %vm549, %v525, 0
        %v575 = vsel %vm549, %v526, 0
        %v578 = vsel %vm549, %v527, 0
        %v581 = vsel %vm549, %v528, 0
        %v584 = vsel %vm549, %v529, 0
        %v587 = vsel %vm549, %v530, 0
        %v590 = vsel %vm549, %v531, 0
        %v593 = vsel %vm549, %v532, 0
        %v596 = vsel %vm549, %v533, 0
        %598 = vmatprep.subr.mxu0 0.0
        %599 = vmatpush1.msra.mxu0 0.0
        %600 = vmatprep.subr.mxu0 0.0
        %601 = vmatpush1.msra.mxu0 0.0
        %602 = vmatprep.subr.mxu0 0.0
        %603 = vmatpush1.msra.mxu0 0.0
        %604 = vmatprep.subr.mxu0 0.0
        %605 = vmatpush1.msra.mxu0 0.0
        %606 = vmatprep.subr.mxu0 0.0
        %607 = vmatpush1.msra.mxu0 0.0
        %608 = vmatprep.subr.mxu0 0.0
        %609 = vmatpush1.msra.mxu0 0.0
        %610 = vmatprep.subr.mxu0 0.0
        %611 = vmatpush1.msra.mxu0 0.0
        %612 = vmatprep.subr.mxu0 0.0
        %613 = vmatpush1.msra.mxu0 0.0
        %614 = vmatprep.subr.mxu0 0.0
        %615 = vmatpush1.msra.mxu0 %v541
        %616 = vmatprep.subr.mxu0 0.0
        %617 = vmatpush1.msra.mxu0 %v540
        %618 = vmatprep.subr.mxu0 0.0
        %619 = vmatpush1.msra.mxu0 %v539
        %620 = vmatprep.subr.mxu0 0.0
        %621 = vmatpush1.msra.mxu0 %v538
        %622 = vmatprep.subr.mxu0 0.0
        %623 = vmatpush1.msra.mxu0 %v537
        %624 = vmatprep.subr.mxu0 0.0
        %625 = vmatpush1.msra.mxu0 %v536
        %626 = vmatprep.subr.mxu0 0.0
        %627 = vmatpush1.msra.mxu0 %v535
        %628 = vmatprep.subr.mxu0 0.0
        %629 = vmatpush1.msra.mxu0 %v534
        %630 = vmatprep.subr.mxu0 0.0
        %631 = vmatpush2.msra.mxu0 0.0
        %632 = vmatprep.subr.mxu0 0.0
        %633 = vmatpush2.msra.mxu0 0.0
        %634 = vmatprep.subr.mxu0 0.0
        %635 = vmatpush2.msra.mxu0 0.0
        %636 = vmatprep.subr.mxu0 0.0
        %637 = vmatpush2.msra.mxu0 0.0
        %638 = vmatprep.subr.mxu0 0.0
        %639 = vmatpush2.msra.mxu0 0.0
        %640 = vmatprep.subr.mxu0 0.0
        %641 = vmatpush2.msra.mxu0 0.0
        %642 = vmatprep.subr.mxu0 0.0
        %643 = vmatpush2.msra.mxu0 0.0
        %644 = vmatprep.subr.mxu0 0.0
        %645 = vmatpush2.msra.mxu0 0.0
        %646 = vmatprep.subr.mxu0 0.0
        %647 = vmatpush2.msra.mxu0 0.0
        %648 = vmatprep.subr.mxu0 0.0
        %649 = vmatpush2.msra.mxu0 0.0
        %650 = vmatprep.subr.mxu0 0.0
        %651 = vmatpush2.msra.mxu0 0.0
        %652 = vmatprep.subr.mxu0 0.0
        %653 = vmatpush2.msra.mxu0 0.0
        %654 = vmatprep.subr.mxu0 0.0
        %655 = vmatpush2.msra.mxu0 0.0
        %656 = vmatprep.subr.mxu0 0.0
        %657 = vmatpush2.msra.mxu0 0.0
        %658 = vmatprep.subr.mxu0 0.0
        %659 = vmatpush2.msra.mxu0 0.0
        %660 = vmatprep.subr.mxu0 0.0
        %661 = vmatpush2.msra.mxu0 0.0
        %662 = vmatprep.mubr.f32.mxu0 0.0
        %663 = vmatmul.mubr.f32.gmra.mxu0 %v551
        %v664 = vpop.f32.mrf.mxu0
        %v665 = vadd.f32 %v547, %v664
        %v666 = vpop.f32.mrf.mxu0
        %667 = vmatprep.mubr.f32.mxu0 0.0
        %668 = vmatmul.mubr.f32.gmra.mxu0 %v554
        %v669 = vpop.f32.mrf.mxu0
        %v670 = vadd.f32 %v547, %v669
        %v671 = vpop.f32.mrf.mxu0
        %672 = vmatprep.mubr.f32.mxu0 0.0
        %673 = vmatmul.mubr.f32.gmra.mxu0 %v557
        %v674 = vpop.f32.mrf.mxu0
        %v675 = vadd.f32 %v547, %v674
        %v676 = vpop.f32.mrf.mxu0
        %677 = vmatprep.mubr.f32.mxu0 0.0
        %678 = vmatmul.mubr.f32.gmra.mxu0 %v560
        %v679 = vpop.f32.mrf.mxu0
        %v680 = vadd.f32 %v547, %v679
        %v681 = vpop.f32.mrf.mxu0
        %682 = vmatprep.mubr.f32.mxu0 0.0
        %683 = vmatmul.mubr.f32.gmra.mxu0 %v563
        %v684 = vpop.f32.mrf.mxu0
        %v685 = vadd.f32 %v547, %v684
        %v686 = vpop.f32.mrf.mxu0
        %687 = vmatprep.mubr.f32.mxu0 0.0
        %688 = vmatmul.mubr.f32.gmra.mxu0 %v566
        %v689 = vpop.f32.mrf.mxu0
        %v690 = vadd.f32 %v547, %v689
        %v691 = vpop.f32.mrf.mxu0
        %692 = vmatprep.mubr.f32.mxu0 0.0
        %693 = vmatmul.mubr.f32.gmra.mxu0 %v569
        %v694 = vpop.f32.mrf.mxu0
        %v695 = vadd.f32 %v547, %v694
        %v696 = vpop.f32.mrf.mxu0
        %697 = vmatprep.mubr.f32.mxu0 0.0
        %698 = vmatmul.mubr.f32.gmra.mxu0 %v572
        %v699 = vpop.f32.mrf.mxu0
        %v700 = vadd.f32 %v547, %v699
        %v701 = vpop.f32.mrf.mxu0
        %702 = vmatprep.mubr.f32.mxu0 0.0
        %703 = vmatmul.mubr.f32.gmra.mxu0 %v575
        %v704 = vpop.f32.mrf.mxu0
        %v705 = vadd.f32 %v547, %v704
        %v706 = vpop.f32.mrf.mxu0
        %707 = vmatprep.mubr.f32.mxu0 0.0
        %708 = vmatmul.mubr.f32.gmra.mxu0 %v578
        %v709 = vpop.f32.mrf.mxu0
        %v710 = vadd.f32 %v547, %v709
        %v711 = vpop.f32.mrf.mxu0
        %712 = vmatprep.mubr.f32.mxu0 0.0
        %713 = vmatmul.mubr.f32.gmra.mxu0 %v581
        %v714 = vpop.f32.mrf.mxu0
        %v715 = vadd.f32 %v547, %v714
        %v716 = vpop.f32.mrf.mxu0
        %717 = vmatprep.mubr.f32.mxu0 0.0
        %718 = vmatmul.mubr.f32.gmra.mxu0 %v584
        %v719 = vpop.f32.mrf.mxu0
        %v720 = vadd.f32 %v547, %v719
        %v721 = vpop.f32.mrf.mxu0
        %722 = vmatprep.mubr.f32.mxu0 0.0
        %723 = vmatmul.mubr.f32.gmra.mxu0 %v587
        %v724 = vpop.f32.mrf.mxu0
        %v725 = vadd.f32 %v547, %v724
        %v726 = vpop.f32.mrf.mxu0
        %727 = vmatprep.mubr.f32.mxu0 0.0
        %728 = vmatmul.mubr.f32.gmra.mxu0 %v590
        %v729 = vpop.f32.mrf.mxu0
        %v730 = vadd.f32 %v547, %v729
        %v731 = vpop.f32.mrf.mxu0
        %732 = vmatprep.mubr.f32.mxu0 0.0
        %733 = vmatmul.mubr.f32.gmra.mxu0 %v593
        %v734 = vpop.f32.mrf.mxu0
        %v735 = vadd.f32 %v547, %v734
        %v736 = vpop.f32.mrf.mxu0
        %737 = vmatprep.mubr.f32.mxu0 0.0
        %738 = vmatmul.mubr.f32.gmra.mxu0 %v596
        %v739 = vpop.f32.mrf.mxu0
        %v740 = vadd.f32 %v547, %v739
        %v741 = vpop.f32.mrf.mxu0
        %742 = vdwg.mxu0
        %v743 = vmax.f32 %v665, 0.0
        %v744 = vmax.f32 %v670, 0.0
        %v745 = vmax.f32 %v675, 0.0
        %v746 = vmax.f32 %v680, 0.0
        %v747 = vmax.f32 %v685, 0.0
        %v748 = vmax.f32 %v690, 0.0
        %v749 = vmax.f32 %v695, 0.0
        %v750 = vmax.f32 %v700, 0.0
        %v751 = vmax.f32 %v705, 0.0
        %v752 = vmax.f32 %v710, 0.0
        %v753 = vmax.f32 %v715, 0.0
        %v754 = vmax.f32 %v720, 0.0
        %v755 = vmax.f32 %v725, 0.0
        %v756 = vmax.f32 %v730, 0.0
        %v757 = vmax.f32 %v735, 0.0
        %v758 = vmax.f32 %v740, 0.0
        %v759 = vld [vmem:[%s5] sm:$0x1]
        %v761 = vlaneseq
        %v762 = vshrl.u32 %v761, 7
        %v763 = vsub.s32 0, %v762
        %v764 = vrot.slane %v759, %v763
        %v766 = vmul.f32 %v743, %v764
        %v767 = vmul.f32 %v744, %v764
        %v768 = vmul.f32 %v745, %v764
        %v769 = vmul.f32 %v746, %v764
        %v770 = vmul.f32 %v747, %v764
        %v771 = vmul.f32 %v748, %v764
        %v772 = vmul.f32 %v749, %v764
        %v773 = vmul.f32 %v750, %v764
        %v774 = vmul.f32 %v751, %v764
        %v775 = vmul.f32 %v752, %v764
        %v776 = vmul.f32 %v753, %v764
        %v777 = vmul.f32 %v754, %v764
        %v778 = vmul.f32 %v755, %v764
        %v779 = vmul.f32 %v756, %v764
        %v780 = vmul.f32 %v757, %v764
        %v781 = vmul.f32 %v758, %v764
        %vm782 = vcmask 261120
        %v783 = vsel %vm782, %v766, 0.0
        %784 = vadd.xlane.f32.xlu0 %v783
        %v785 = vpop.xlane.xlu0 %784
        %v786 = vsel %vm782, %v767, 0.0
        %787 = vadd.xlane.f32.xlu0 %v786
        %v788 = vpop.xlane.xlu0 %787
        %v789 = vsel %vm782, %v768, 0.0
        %790 = vadd.xlane.f32.xlu0 %v789
        %v791 = vpop.xlane.xlu0 %790
        %v792 = vsel %vm782, %v769, 0.0
        %793 = vadd.xlane.f32.xlu0 %v792
        %v794 = vpop.xlane.xlu0 %793
        %v795 = vsel %vm782, %v770, 0.0
        %796 = vadd.xlane.f32.xlu0 %v795
        %v797 = vpop.xlane.xlu0 %796
        %v798 = vsel %vm782, %v771, 0.0
        %799 = vadd.xlane.f32.xlu0 %v798
        %v800 = vpop.xlane.xlu0 %799
        %v801 = vsel %vm782, %v772, 0.0
        %802 = vadd.xlane.f32.xlu0 %v801
        %v803 = vpop.xlane.xlu0 %802
        %v804 = vsel %vm782, %v773, 0.0
        %805 = vadd.xlane.f32.xlu0 %v804
        %v806 = vpop.xlane.xlu0 %805
        %v807 = vsel %vm782, %v774, 0.0
        %808 = vadd.xlane.f32.xlu0 %v807
        %v809 = vpop.xlane.xlu0 %808
        %v810 = vsel %vm782, %v775, 0.0
        %811 = vadd.xlane.f32.xlu0 %v810
        %v812 = vpop.xlane.xlu0 %811
        %v813 = vsel %vm782, %v776, 0.0
        %814 = vadd.xlane.f32.xlu0 %v813
        %v815 = vpop.xlane.xlu0 %814
        %v816 = vsel %vm782, %v777, 0.0
        %817 = vadd.xlane.f32.xlu0 %v816
        %v818 = vpop.xlane.xlu0 %817
        %v819 = vsel %vm782, %v778, 0.0
        %820 = vadd.xlane.f32.xlu0 %v819
        %v821 = vpop.xlane.xlu0 %820
        %v822 = vsel %vm782, %v779, 0.0
        %823 = vadd.xlane.f32.xlu0 %v822
        %v824 = vpop.xlane.xlu0 %823
        %v825 = vsel %vm782, %v780, 0.0
        %826 = vadd.xlane.f32.xlu0 %v825
        %v827 = vpop.xlane.xlu0 %826
        %v828 = vsel %vm782, %v781, 0.0
        %829 = vadd.xlane.f32.xlu0 %v828
        %v830 = vpop.xlane.xlu0 %829
        %s831 = sld [smem:[#allocation2]]
        %v832 = vstv %s831
        %v833 = vadd.f32 %v785, %v832
        %v834 = vadd.f32 %v788, %v832
        %v835 = vadd.f32 %v791, %v832
        %v836 = vadd.f32 %v794, %v832
        %v837 = vadd.f32 %v797, %v832
        %v838 = vadd.f32 %v800, %v832
        %v839 = vadd.f32 %v803, %v832
        %v840 = vadd.f32 %v806, %v832
        %v841 = vadd.f32 %v809, %v832
        %v842 = vadd.f32 %v812, %v832
        %v843 = vadd.f32 %v815, %v832
        %v844 = vadd.f32 %v818, %v832
        %v845 = vadd.f32 %v821, %v832
        %v846 = vadd.f32 %v824, %v832
        %v847 = vadd.f32 %v827, %v832
        %v848 = vadd.f32 %v830, %v832
        %v865 = vlaneseq
        %v866 = vand.u32 %v865, 127
        %v867 = vlaneseq
        %v868 = vshrl.u32 %v867, 7
        %v869 = vsub.s32 %v866, %v868
        %v870 = vrot.slane %v833, %v869
        %v871 = vadd.s32 %v866, 4294967288
        %v872 = vlaneseq
        %v873 = vshrl.u32 %v872, 7
        %v874 = vsub.s32 %v871, %v873
        %v875 = vrot.slane %v834, %v874
        %vm876 = vcmask 130112
        %v877 = vsel %vm876, %v875, %v870
        %v878 = vadd.s32 %v866, 4294967280
        %v879 = vlaneseq
        %v880 = vshrl.u32 %v879, 7
        %v881 = vsub.s32 %v878, %v880
        %v882 = vrot.slane %v835, %v881
        %vm883 = vcmask 195712
        %v884 = vsel %vm883, %v882, %v877
        %v885 = vadd.s32 %v866, 4294967272
        %v886 = vlaneseq
        %v887 = vshrl.u32 %v886, 7
        %v888 = vsub.s32 %v885, %v887
        %v889 = vrot.slane %v836, %v888
        %vm890 = vcmask 261312
        %v891 = vsel %vm890, %v889, %v884
        %v892 = vadd.s32 %v866, 4294967264
        %v893 = vlaneseq
        %v894 = vshrl.u32 %v893, 7
        %v895 = vsub.s32 %v892, %v894
        %v896 = vrot.slane %v837, %v895
        %vm897 = vcmask 326912
        %v898 = vsel %vm897, %v896, %v891
        %v899 = vadd.s32 %v866, 4294967256
        %v900 = vlaneseq
        %v901 = vshrl.u32 %v900, 7
        %v902 = vsub.s32 %v899, %v901
        %v903 = vrot.slane %v838, %v902
        %vm904 = vcmask 392512
        %v905 = vsel %vm904, %v903, %v898
        %v906 = vadd.s32 %v866, 4294967248
        %v907 = vlaneseq
        %v908 = vshrl.u32 %v907, 7
        %v909 = vsub.s32 %v906, %v908
        %v910 = vrot.slane %v839, %v909
        %vm911 = vcmask 458112
        %v912 = vsel %vm911, %v910, %v905
        %v913 = vadd.s32 %v866, 4294967240
        %v914 = vlaneseq
        %v915 = vshrl.u32 %v914, 7
        %v916 = vsub.s32 %v913, %v915
        %v917 = vrot.slane %v840, %v916
        %vm918 = vcmask 523712
        %v919 = vsel %vm918, %v917, %v912
        %v920 = vadd.s32 %v866, 4294967232
        %v921 = vlaneseq
        %v922 = vshrl.u32 %v921, 7
        %v923 = vsub.s32 %v920, %v922
        %v924 = vrot.slane %v841, %v923
        %vm925 = vcmask 589312
        %v926 = vsel %vm925, %v924, %v919
        %v927 = vadd.s32 %v866, 4294967224
        %v928 = vlaneseq
        %v929 = vshrl.u32 %v928, 7
        %v930 = vsub.s32 %v927, %v929
        %v931 = vrot.slane %v842, %v930
        %vm932 = vcmask 654912
        %v933 = vsel %vm932, %v931, %v926
        %v934 = vadd.s32 %v866, 4294967216
        %v935 = vlaneseq
        %v936 = vshrl.u32 %v935, 7
        %v937 = vsub.s32 %v934, %v936
        %v938 = vrot.slane %v843, %v937
        %vm939 = vcmask 720512
        %v940 = vsel %vm939, %v938, %v933
        %v941 = vadd.s32 %v866, 4294967208
        %v942 = vlaneseq
        %v943 = vshrl.u32 %v942, 7
        %v944 = vsub.s32 %v941, %v943
        %v945 = vrot.slane %v844, %v944
        %vm946 = vcmask 786112
        %v947 = vsel %vm946, %v945, %v940
        %v948 = vadd.s32 %v866, 4294967200
        %v949 = vlaneseq
        %v950 = vshrl.u32 %v949, 7
        %v951 = vsub.s32 %v948, %v950
        %v952 = vrot.slane %v845, %v951
        %vm953 = vcmask 851712
        %v954 = vsel %vm953, %v952, %v947
        %v955 = vadd.s32 %v866, 4294967192
        %v956 = vlaneseq
        %v957 = vshrl.u32 %v956, 7
        %v958 = vsub.s32 %v955, %v957
        %v959 = vrot.slane %v846, %v958
        %vm960 = vcmask 917312
        %v961 = vsel %vm960, %v959, %v954
        %v962 = vadd.s32 %v866, 4294967184
        %v963 = vlaneseq
        %v964 = vshrl.u32 %v963, 7
        %v965 = vsub.s32 %v962, %v964
        %v966 = vrot.slane %v847, %v965
        %vm967 = vcmask 982912
        %v968 = vsel %vm967, %v966, %v961
        %v969 = vadd.s32 %v866, 4294967176
        %v970 = vlaneseq
        %v971 = vshrl.u32 %v970, 7
        %v972 = vsub.s32 %v969, %v971
        %v973 = vrot.slane %v848, %v972
        %vm974 = vcmask 1048512
        %v975 = vsel %vm974, %v973, %v968
        %977 = vst [vmem:[%s284] sm:$0x1] %v975
        %s978 = sand.u32 %s182, 1
        %s979 = scalar_lea.sflag [#allocation4], %s978
        %s980 = sand.u32 %s182, 1
        %s981 = scalar_lea.vmem [#allocation3], %s980
        // Predicated region
        $region49: #{tpu_custom_call.1} parent=47 // pred_check
          %p982 = pneg %p192
        $region50: #{tpu_custom_call.1} parent=47 // pred_check_branch
          %984 = sbr.rel (%p982) target = $region52
        $region51: #{tpu_custom_call.1} parent=47 // pred_region
          %s986 = ssub.s32 16, 16
          %987 = vsyncadd %s979, %s986
          %s988 = smul.addr %s22, 16
          %s989 = scalar_lea.hbm %s7, %s988
          %s991 = sshll.u32 %s981, 4
          %s992 = int_to_ptr.vmem [resolvable:$true] %s991
          %994 = dma.vmem_to_hbm [thread:$0]  %s992, 16, %s989, %s979
        $region52: #{tpu_custom_call.1} parent=47 // pred_fallthru
          _
      $region48: #{tpu_custom_call.1} parent=5 // pred_fallthru
        _
      %p995 = scmp.le.s32.totalorder 2, %s17
      // Predicated region
      $region53: #{tpu_custom_call.1} parent=5 // pred_check
        %p996 = pneg %p995
      $region54: #{tpu_custom_call.1} parent=5 // pred_check_branch
        %998 = sbr.rel (%p996) target = $region56
      $region55: #{tpu_custom_call.1} parent=5 // pred_region
        %s999 = ssub.s32 %s17, 2
        // Predicated region
        $region57: #{tpu_custom_call.1} parent=55 // pred_check
          %p1000 = pneg %p198
        $region58: #{tpu_custom_call.1} parent=55 // pred_check_branch
          %1002 = sbr.rel (%p1000) target = $region60
        $region59: #{tpu_custom_call.1} parent=55 // pred_region
          %s1003 = sand.u32 %s183, 1
          %s1004 = scalar_lea.sflag [#allocation4], %s1003
          %s1005 = sand.u32 %s183, 1
          %s1006 = scalar_lea.vmem [#allocation3], %s1005
          %1007 = dma.done %s1004, 16
        $region60: #{tpu_custom_call.1} parent=55 // pred_fallthru
          _
      $region56: #{tpu_custom_call.1} parent=5 // pred_fallthru
        _
    $region6: #{tpu_custom_call.1} parent=1 // loop_footer
      %s21 = sadd.s32 1, %s17
    $region7: #{tpu_custom_call.1} parent=1 // loop_footer_branch
      %16 = sbr.rel target = $region3
    $region8: #{tpu_custom_call.1} parent=1 // loop_exit
      _
    %1008 = vsyncpa [#allocation4], 1
    %s1009 = scalar_lea.sflag [#allocation4], 1
    %1010 = vsyncpa %s1009, 1

</llo_original>
